<compile_context>
chip_gen: v7x
topology: tpu7x:2x2x1
jax: 0.10.0
libtpu: 0.0.40
codegen_flags: <defaults>
</compile_context>

<pallas_src>
import functools

import jax
import jax.numpy as jnp
from jax import lax
from jax.experimental import pallas as pl
from jax.experimental.pallas import tpu as pltpu


def _round_up(x, m):
    return ((x + m - 1) // m) * m


def _choose_batch_tile(batch, batch_block):
    """Pick (bm, padded_batch).

    Small batches: a single full-dim block (padded to a multiple of 8 so the
    output store is sublane-dense).  Larger batches: bm is a multiple of 128
    (lane-dense transposed prior) and the grid has >= 2 steps so v7x can shard
    the batch axis over both TensorCores.
    """
    batch_block = max(128, _round_up(batch_block, 128))
    bp = _round_up(batch, 8)
    if bp < 256:
        return bp, bp                                   # one full-dim block
    bm = min(batch_block, _round_up((bp + 1) // 2, 128))  # >= 2 grid steps
    return bm, _round_up(bp, bm)


# ----------------------------------------------------------------------------
# Fused Pallas kernel: VQC surrogate + ClassicalGenerator MLP + fused head
# ----------------------------------------------------------------------------
def _hybrid_generator_kernel(n_dense, phases_ref, theta_ref, *refs):
    """refs = [(W_i, b_i) * n_dense, W_head, b_head, head_out]."""
    dense_refs = refs[:2 * n_dense]
    whead_ref = refs[2 * n_dense]
    bhead_ref = refs[2 * n_dense + 1]
    out_ref = refs[2 * n_dense + 2]
    n_layers = theta_ref.shape[1]

    # --- VQC prior surrogate, transposed (n_states, bm) layout --------------
    # Batch rides the 128-lane axis so cos/sin/normalize use full vregs; the
    # state shift is an XLU sublane roll (free slot) instead of a matmul.
    phases = phases_ref[...]                          # (n_states, bm) f32
    thetas = theta_ref[...]                           # (n_states, n_layers)
    for l in range(n_layers):
        phases = phases + thetas[:, l:l + 1]
        phases = jnp.cos(phases) + pltpu.roll(jnp.sin(phases), shift=1, axis=0)
    probs = jnp.cos(phases) ** 2
    denom = jnp.sum(probs, axis=0, keepdims=True)               # (1, bm)
    prior = probs * pl.reciprocal(denom + 1e-6, approx=True)    # EUP approx

    # --- MultiDenseLayers: Linear -> Tanh (bf16 matmul operands, f32 acc) ---
    # Padded bias = 0 -> tanh(0) = 0 -> padded rows of the next weight are
    # zero, so padding is mathematically inert.  The first matmul contracts
    # the n_states axis directly from the transposed prior.
    h = prior
    for i in range(n_dense):
        w = dense_refs[2 * i][...]                    # bf16 (in_pad, out_pad)
        b = dense_refs[2 * i + 1][...]                # f32  (1, out_pad)
        if i == 0:
            z = lax.dot_general(h.astype(w.dtype), w,
                                (((0,), (0,)), ((), ())),
                                preferred_element_type=jnp.float32)
        else:
            z = jnp.dot(h.astype(w.dtype), w,
                        preferred_element_type=jnp.float32)
        h = jnp.tanh(z + b)

    # --- Fused edges+nodes head (symmetrize + permute pre-folded) -----------
    wh = whead_ref[...]
    out_ref[...] = (jnp.dot(h.astype(wh.dtype), wh,
                            preferred_element_type=jnp.float32)
                    + bhead_ref[...])
    # TODO(synk): dropout is identity (eval semantics / dropout_rate == 0).


# ----------------------------------------------------------------------------
# Wrapper: mirrors QfcVqcHybridGenerator.forward
# ----------------------------------------------------------------------------
def hybrid_generator_forward(x, params, *, input_dim, n_states, vertexes,
                             edges, nodes, rng_key, batch_block=1024):
    """Ignores x's content (uses only its batch size), samples z ~ U[0,1),
    runs the fused VQC-surrogate + classical-generator Pallas kernel.  The
    epilogue is slice + reshape only (symmetrize/permute live in the head
    weights)."""
    batch = x.shape[0]
    n_dense = len(params["dense_ws"])
    e_flat = edges * vertexes * vertexes
    n_flat = vertexes * nodes
    head_pad = params["w_head"].shape[1]

    # z ~ U[0,1) (torch.rand equivalent) + phase encoding (equally spaced
    # repetitions), built directly in the transposed (n_states, batch) layout.
    z = jax.random.uniform(rng_key, (input_dim, batch), dtype=jnp.float32)
    reps = -(-n_states // input_dim)  # ceil
    phases0 = jnp.tile(z * jnp.pi, (reps, 1))[:n_states, :]

    bm, batch_pad = _choose_batch_tile(batch, batch_block)
    if batch_pad != batch:
        phases0 = jnp.pad(phases0, ((0, 0), (0, batch_pad - batch)))
    grid = (batch_pad // bm,)

    flat_inputs = [phases0, params["thetas"]]
    in_specs = [
        pl.BlockSpec((n_states, bm), lambda i: (0, i)),
        pl.BlockSpec(params["thetas"].shape, lambda i: (0, 0)),
    ]
    for w, b in zip(params["dense_ws"], params["dense_bs"]):
        flat_inputs += [w, b]
        in_specs += [pl.BlockSpec(w.shape, lambda i: (0, 0)),
                     pl.BlockSpec(b.shape, lambda i: (0, 0))]
    flat_inputs += [params["w_head"], params["b_head"]]
    in_specs += [pl.BlockSpec(params["w_head"].shape, lambda i: (0, 0)),
                 pl.BlockSpec(params["b_head"].shape, lambda i: (0, 0))]

    head_out = pl.pallas_call(
        functools.partial(_hybrid_generator_kernel, n_dense),
        out_shape=jax.ShapeDtypeStruct((batch_pad, head_pad), jnp.float32),
        grid=grid,
        in_specs=in_specs,
        out_specs=pl.BlockSpec((bm, head_pad), lambda i: (i, 0)),
        compiler_params=pltpu.CompilerParams(
            dimension_semantics=("parallel",),
            vmem_limit_bytes=32 * 1024 * 1024),
    )(*flat_inputs)

    # Epilogue: just slice + reshape (no symmetrize / transpose / re-store).
    head = head_out[:batch]
    edges_logits = head[:, :e_flat].reshape(batch, vertexes, vertexes, edges)
    nodes_logits = head[:, e_flat:e_flat + n_flat].reshape(
        batch, vertexes, nodes)
    return edges_logits, nodes_logits


# ----------------------------------------------------------------------------
# Deterministic parameter init (PyTorch-style, then padded / fused / folded)
# ----------------------------------------------------------------------------
def init_params(key, *, n_states, conv_dims, vertexes, edges, nodes, n_layers):
    keys = jax.random.split(key, 2 * len(conv_dims) + 5)
    ki = iter(range(len(keys)))

    hidden_pad = [_round_up(d, 128) for d in conv_dims]

    # Dense stack: zero-padded to 128-lane widths, weights stored bf16
    # (matmul operands); biases stay f32.
    dense_ws, dense_bs = [], []
    in_dim, in_pad = n_states, n_states
    for out_dim, out_pad in zip(conv_dims, hidden_pad):
        scale = 1.0 / (in_dim ** 0.5)
        w = jax.random.uniform(keys[next(ki)], (in_dim, out_dim),
                               minval=-scale, maxval=scale, dtype=jnp.float32)
        b = jax.random.uniform(keys[next(ki)], (out_dim,),
                               minval=-scale, maxval=scale, dtype=jnp.float32)
        w_p = jnp.zeros((in_pad, out_pad), jnp.float32)
        w_p = w_p.at[:in_dim, :out_dim].set(w)
        b_p = jnp.zeros((1, out_pad), jnp.float32).at[0, :out_dim].set(b)
        dense_ws.append(w_p.astype(jnp.bfloat16))
        dense_bs.append(b_p)
        in_dim, in_pad = out_dim, out_pad

    last, last_pad = conv_dims[-1], hidden_pad[-1]
    e_flat = edges * vertexes * vertexes
    n_flat = vertexes * nodes
    head_pad = _round_up(e_flat + n_flat, 128)

    scale = 1.0 / (last ** 0.5)
    we = jax.random.uniform(keys[next(ki)], (last, e_flat),
                            minval=-scale, maxval=scale, dtype=jnp.float32)
    be = jax.random.uniform(keys[next(ki)], (e_flat,),
                            minval=-scale, maxval=scale, dtype=jnp.float32)
    wn = jax.random.uniform(keys[next(ki)], (last, n_flat),
                            minval=-scale, maxval=scale, dtype=jnp.float32)
    bn = jax.random.uniform(keys[next(ki)], (n_flat,),
                            minval=-scale, maxval=scale, dtype=jnp.float32)

    # Fold (e + e^T)/2 symmetrization + permute(0,2,3,1) into the edges head
    # (it is a linear map on head outputs): column (i*V*E + j*E + e) of the
    # new weight = 0.5 * (We[:, e*V*V + i*V + j] + We[:, e*V*V + j*V + i]).
    V, E = vertexes, edges
    ii, jj, ee = jnp.meshgrid(jnp.arange(V), jnp.arange(V), jnp.arange(E),
                              indexing="ij")
    idx_a = ((ee * V + ii) * V + jj).reshape(-1)
    idx_b = ((ee * V + jj) * V + ii).reshape(-1)
    we_sym = 0.5 * (we[:, idx_a] + we[:, idx_b])
    be_sym = 0.5 * (be[idx_a] + be[idx_b])

    # Fused + zero-padded head:  [We_sym | Wn | 0],  [be_sym | bn | 0].
    w_head = jnp.zeros((last_pad, head_pad), jnp.float32)
    w_head = w_head.at[:last, :e_flat].set(we_sym)
    w_head = w_head.at[:last, e_flat:e_flat + n_flat].set(wn)
    b_head = jnp.zeros((1, head_pad), jnp.float32)
    b_head = b_head.at[0, :e_flat].set(be_sym)
    b_head = b_head.at[0, e_flat:e_flat + n_flat].set(bn)

    # Stacked VQC layer phases, stored (n_states, n_layers) so the kernel
    # broadcasts one column per layer over the lane-major batch axis.
    thetas = jax.random.uniform(keys[next(ki)], (n_states, n_layers),
                                minval=0.0, maxval=2.0 * jnp.pi,
                                dtype=jnp.float32)

    return {
        "dense_ws": dense_ws, "dense_bs": dense_bs,
        "w_head": w_head.astype(jnp.bfloat16), "b_head": b_head,
        "thetas": thetas,
    }


# ----------------------------------------------------------------------------
if __name__ == "__main__":
    CONV_DIMS = [32, 64]
    VERTEXES = 8
    EDGES = 4
    NODES = 5
    N_STATES = 8              # z_dim of the classical generator
    N_LAYERS = 2
    INPUT_DIM = 2
    BATCH = 2

    master = jax.random.PRNGKey(0)
    k_params, k_x, k_z = jax.random.split(master, 3)

    params = init_params(
        k_params, n_states=N_STATES, conv_dims=CONV_DIMS,
        vertexes=VERTEXES, edges=EDGES, nodes=NODES, n_layers=N_LAYERS)

    # x is only used for its batch size (the module ignores its content).
    x = jax.random.normal(k_x, (BATCH, INPUT_DIM), dtype=jnp.float32)

    edges_logits, nodes_logits = hybrid_generator_forward(
        x, params, input_dim=INPUT_DIM, n_states=N_STATES,
        vertexes=VERTEXES, edges=EDGES, nodes=NODES, rng_key=k_z)

    jax.block_until_ready((edges_logits, nodes_logits))

    assert edges_logits.shape == (BATCH, VERTEXES, VERTEXES, EDGES)
    assert nodes_logits.shape == (BATCH, VERTEXES, NODES)
    # Symmetry of edge logits over the two vertex axes (exact: folded weights).
    assert jnp.allclose(edges_logits,
                        jnp.transpose(edges_logits, (0, 2, 1, 3)), atol=1e-5)
    assert bool(jnp.all(jnp.isfinite(edges_logits)))
    assert bool(jnp.all(jnp.isfinite(nodes_logits)))
    print("KERNEL_OK")
</pallas_src>

<mosaic_0001>
module attributes {stable_mosaic.version = 11 : i64} {
  func.func @_hybrid_generator_kernel(%arg0: i32, %arg1: memref<8x8xf32, #tpu.memory_space<vmem>>, %arg2: memref<8x2xf32, #tpu.memory_space<vmem>>, %arg3: memref<8x128xbf16, #tpu.memory_space<vmem>>, %arg4: memref<1x128xf32, #tpu.memory_space<vmem>>, %arg5: memref<128x128xbf16, #tpu.memory_space<vmem>>, %arg6: memref<1x128xf32, #tpu.memory_space<vmem>>, %arg7: memref<128x384xbf16, #tpu.memory_space<vmem>>, %arg8: memref<1x384xf32, #tpu.memory_space<vmem>>, %arg9: memref<8x384xf32, #tpu.memory_space<vmem>>) attributes {dimension_semantics = [#tpu.dimension_semantics<parallel>], iteration_bounds = array<i64: 1>, scalar_prefetch = 0 : i64, scratch_operands = 0 : i64, tpu.core_type = #tpu.core_type<tc>, window_params = [{transform_indices = @transform_0, window_bounds = array<i64: 8, 8>}, {pipeline_mode = #tpu.pipeline_mode<synchronous>, transform_indices = @transform_1, window_bounds = array<i64: 8, 2>}, {pipeline_mode = #tpu.pipeline_mode<synchronous>, transform_indices = @transform_2, window_bounds = array<i64: 8, 128>}, {pipeline_mode = #tpu.pipeline_mode<synchronous>, transform_indices = @transform_3, window_bounds = array<i64: 1, 128>}, {pipeline_mode = #tpu.pipeline_mode<synchronous>, transform_indices = @transform_4, window_bounds = array<i64: 128, 128>}, {pipeline_mode = #tpu.pipeline_mode<synchronous>, transform_indices = @transform_5, window_bounds = array<i64: 1, 128>}, {pipeline_mode = #tpu.pipeline_mode<synchronous>, transform_indices = @transform_6, window_bounds = array<i64: 128, 384>}, {pipeline_mode = #tpu.pipeline_mode<synchronous>, transform_indices = @transform_7, window_bounds = array<i64: 1, 384>}, {transform_indices = @transform_8, window_bounds = array<i64: 8, 384>}]} {
    %c0 = arith.constant 0 : index
    %c0_0 = arith.constant 0 : index
    %0 = vector.load %arg1[%c0, %c0_0] : memref<8x8xf32, #tpu.memory_space<vmem>>, vector<8x8xf32>
    %c0_1 = arith.constant 0 : index
    %c0_2 = arith.constant 0 : index
    %1 = vector.load %arg2[%c0_1, %c0_2] : memref<8x2xf32, #tpu.memory_space<vmem>>, vector<8x2xf32>
    %2 = vector.extract_strided_slice %1 {offsets = [0, 0], sizes = [8, 1], strides = [1, 1]} : vector<8x2xf32> to vector<8x1xf32>
    %3 = vector.broadcast %2 : vector<8x1xf32> to vector<8x8xf32>
    %4 = arith.addf %0, %3 : vector<8x8xf32>
    %5 = math.cos %4 : vector<8x8xf32>
    %6 = math.sin %4 : vector<8x8xf32>
    %c1_i32 = arith.constant 1 : i32
    %7 = tpu.dynamic_rotate %6 by %c1_i32 dim 0 : vector<8x8xf32>, i32 -> vector<8x8xf32>
    %8 = arith.addf %5, %7 : vector<8x8xf32>
    %9 = vector.extract_strided_slice %1 {offsets = [0, 1], sizes = [8, 1], strides = [1, 1]} : vector<8x2xf32> to vector<8x1xf32>
    %10 = vector.broadcast %9 : vector<8x1xf32> to vector<8x8xf32>
    %11 = arith.addf %8, %10 : vector<8x8xf32>
    %12 = math.cos %11 : vector<8x8xf32>
    %13 = math.sin %11 : vector<8x8xf32>
    %c1_i32_3 = arith.constant 1 : i32
    %14 = tpu.dynamic_rotate %13 by %c1_i32_3 dim 0 : vector<8x8xf32>, i32 -> vector<8x8xf32>
    %15 = arith.addf %12, %14 : vector<8x8xf32>
    %16 = math.cos %15 : vector<8x8xf32>
    %17 = arith.mulf %16, %16 : vector<8x8xf32>
    %cst = arith.constant dense<0.000000e+00> : vector<8xf32>
    %18 = vector.multi_reduction <add>, %17, %cst [0] : vector<8x8xf32> to vector<8xf32>
    %19 = vector.shape_cast %18 : vector<8xf32> to vector<1x8xf32>
    %cst_4 = arith.constant 9.99999997E-7 : f32
    %20 = vector.broadcast %cst_4 : f32 to vector<1x8xf32>
    %21 = arith.addf %19, %20 : vector<1x8xf32>
    %22 = tpu.reciprocal %21 {approx = true} : vector<1x8xf32> -> vector<1x8xf32>
    %23 = vector.broadcast %22 : vector<1x8xf32> to vector<8x8xf32>
    %24 = arith.mulf %17, %23 : vector<8x8xf32>
    %c0_5 = arith.constant 0 : index
    %c0_6 = arith.constant 0 : index
    %25 = vector.load %arg3[%c0_5, %c0_6] : memref<8x128xbf16, #tpu.memory_space<vmem>>, vector<8x128xbf16>
    %c0_7 = arith.constant 0 : index
    %c0_8 = arith.constant 0 : index
    %26 = vector.load %arg4[%c0_7, %c0_8] : memref<1x128xf32, #tpu.memory_space<vmem>>, vector<1x128xf32>
    %27 = arith.truncf %24 : vector<8x8xf32> to vector<8x8xbf16>
    %cst_9 = arith.constant dense<0.000000e+00> : vector<8x128xf32>
    %28 = tpu.matmul %27, %25, %cst_9 {dimension_numbers = #tpu.dot_dimension_numbers<[0], [0], [1], [1], [0, 1, 1, 1], [], []>} : vector<8x8xbf16>, vector<8x128xbf16>, vector<8x128xf32> -> vector<8x128xf32>
    %29 = vector.broadcast %26 : vector<1x128xf32> to vector<8x128xf32>
    %30 = arith.addf %28, %29 : vector<8x128xf32>
    %31 = math.tanh %30 : vector<8x128xf32>
    %c0_10 = arith.constant 0 : index
    %c0_11 = arith.constant 0 : index
    %32 = vector.load %arg5[%c0_10, %c0_11] : memref<128x128xbf16, #tpu.memory_space<vmem>>, vector<128x128xbf16>
    %c0_12 = arith.constant 0 : index
    %c0_13 = arith.constant 0 : index
    %33 = vector.load %arg6[%c0_12, %c0_13] : memref<1x128xf32, #tpu.memory_space<vmem>>, vector<1x128xf32>
    %34 = arith.truncf %31 : vector<8x128xf32> to vector<8x128xbf16>
    %cst_14 = arith.constant dense<0.000000e+00> : vector<8x128xf32>
    %35 = tpu.matmul %34, %32, %cst_14 {dimension_numbers = #tpu.dot_dimension_numbers<[1], [0], [0], [1], [0, 0, 1, 1], [], []>} : vector<8x128xbf16>, vector<128x128xbf16>, vector<8x128xf32> -> vector<8x128xf32>
    %36 = vector.broadcast %33 : vector<1x128xf32> to vector<8x128xf32>
    %37 = arith.addf %35, %36 : vector<8x128xf32>
    %38 = math.tanh %37 : vector<8x128xf32>
    %c0_15 = arith.constant 0 : index
    %c0_16 = arith.constant 0 : index
    %39 = vector.load %arg7[%c0_15, %c0_16] : memref<128x384xbf16, #tpu.memory_space<vmem>>, vector<128x384xbf16>
    %40 = arith.truncf %38 : vector<8x128xf32> to vector<8x128xbf16>
    %cst_17 = arith.constant dense<0.000000e+00> : vector<8x384xf32>
    %41 = tpu.matmul %40, %39, %cst_17 {dimension_numbers = #tpu.dot_dimension_numbers<[1], [0], [0], [1], [0, 0, 1, 1], [], []>} : vector<8x128xbf16>, vector<128x384xbf16>, vector<8x384xf32> -> vector<8x384xf32>
    %c0_18 = arith.constant 0 : index
    %c0_19 = arith.constant 0 : index
    %42 = vector.load %arg8[%c0_18, %c0_19] : memref<1x384xf32, #tpu.memory_space<vmem>>, vector<1x384xf32>
    %43 = vector.broadcast %42 : vector<1x384xf32> to vector<8x384xf32>
    %44 = arith.addf %41, %43 : vector<8x384xf32>
    %c0_20 = arith.constant 0 : index
    %c0_21 = arith.constant 0 : index
    %45 = vector.load %arg9[%c0_20, %c0_21] : memref<8x384xf32, #tpu.memory_space<vmem>>, vector<8x384xf32>
    tpu.vector_store %arg9[%c0_20, %c0_21], %44 {strides = array<i32>} : memref<8x384xf32, #tpu.memory_space<vmem>>, vector<8x384xf32>,
    return
  }
  func.func @transform_0(%arg0: i32) -> (i32, i32) {
    %c0_i32 = arith.constant 0 : i32
    %c0_i32_0 = arith.constant 0 : i32
    return %c0_i32, %arg0 : i32, i32
  }
  func.func @transform_1(%arg0: i32) -> (i32, i32) {
    %c0_i32 = arith.constant 0 : i32
    %c0_i32_0 = arith.constant 0 : i32
    %c0_i32_1 = arith.constant 0 : i32
    return %c0_i32, %c0_i32_0 : i32, i32
  }
  func.func @transform_2(%arg0: i32) -> (i32, i32) {
    %c0_i32 = arith.constant 0 : i32
    %c0_i32_0 = arith.constant 0 : i32
    %c0_i32_1 = arith.constant 0 : i32
    return %c0_i32, %c0_i32_0 : i32, i32
  }
  func.func @transform_3(%arg0: i32) -> (i32, i32) {
    %c0_i32 = arith.constant 0 : i32
    %c0_i32_0 = arith.constant 0 : i32
    %c0_i32_1 = arith.constant 0 : i32
    return %c0_i32, %c0_i32_0 : i32, i32
  }
  func.func @transform_4(%arg0: i32) -> (i32, i32) {
    %c0_i32 = arith.constant 0 : i32
    %c0_i32_0 = arith.constant 0 : i32
    %c0_i32_1 = arith.constant 0 : i32
    return %c0_i32, %c0_i32_0 : i32, i32
  }
  func.func @transform_5(%arg0: i32) -> (i32, i32) {
    %c0_i32 = arith.constant 0 : i32
    %c0_i32_0 = arith.constant 0 : i32
    %c0_i32_1 = arith.constant 0 : i32
    return %c0_i32, %c0_i32_0 : i32, i32
  }
  func.func @transform_6(%arg0: i32) -> (i32, i32) {
    %c0_i32 = arith.constant 0 : i32
    %c0_i32_0 = arith.constant 0 : i32
    %c0_i32_1 = arith.constant 0 : i32
    return %c0_i32, %c0_i32_0 : i32, i32
  }
  func.func @transform_7(%arg0: i32) -> (i32, i32) {
    %c0_i32 = arith.constant 0 : i32
    %c0_i32_0 = arith.constant 0 : i32
    %c0_i32_1 = arith.constant 0 : i32
    return %c0_i32, %c0_i32_0 : i32, i32
  }
  func.func @transform_8(%arg0: i32) -> (i32, i32) {
    %c0_i32 = arith.constant 0 : i32
    %c0_i32_0 = arith.constant 0 : i32
    return %arg0, %c0_i32 : i32, i32
  }
}

</mosaic_0001>

<llo_original>
// kernel: tpu_custom_call.1
$region0: #{tpu_custom_call.1}
  #allocation0 [shape = 'u32[]', space=smem, size = 0x4, offset = 0x4, fixed_abs, tag = 'smem constant byte address 0x4 - core index']
  #allocation1 [shape = 'u32[144,128]{1,0:T(1,128)}', space=vmem, size = 0x12000, scoped, tag = 'internal scratch']
  %s0 = inlined_call_operand.vmem [shape: f32[8,8], index: 0, kind: input, shape index: {}]
  %s1 = inlined_call_operand.vmem [shape: f32[8,2], index: 1, kind: input, shape index: {}]
  %s2 = inlined_call_operand.vmem [shape: bf16[8,128], index: 2, kind: input, shape index: {}]
  %s3 = inlined_call_operand.vmem [shape: f32[1,128], index: 3, kind: input, shape index: {}]
  %s4 = inlined_call_operand.hbm [shape: bf16[128,128], index: 4, kind: input, shape index: {}]
  %s5 = inlined_call_operand.vmem [shape: f32[1,128], index: 5, kind: input, shape index: {}]
  %s6 = inlined_call_operand.hbm [shape: bf16[128,384], index: 6, kind: input, shape index: {}]
  %s7 = inlined_call_operand.vmem [shape: f32[1,384], index: 7, kind: input, shape index: {}]
  %s8 = inlined_call_operand.hbm [shape: f32[8,384], index: 8, kind: output, shape index: {}]
  %s9 = sld [smem:[#allocation0]]
  $region50: #{tpu_custom_call.1} parent=0
    _
  %s11 = ssub.s32 1, %s9
  %s12 = scalar_select 0, %s11, %s9
  $region1: #{tpu_custom_call.1} parent=0
    #allocation2 [shape = 'u8[32768]{0}', space=vmem, size = 0x8000, scoped, tag = 'input window, operand 4, single buffered']
    #allocation3 [shape = 's32[1]{0}', space=sflag, size = 0x4, scoped, tag = 'scoped memory for tpu_custom_call.1']
    #allocation4 [shape = 's32[1]{0}', space=sflag, size = 0x4, scoped, tag = 'scoped memory for tpu_custom_call.1']
    #allocation5 [shape = 'u8[98304]{0}', space=vmem, size = 0x18000, scoped, tag = 'input window, operand 6, single buffered']
    #allocation6 [shape = 's32[1]{0}', space=sflag, size = 0x4, scoped, tag = 'scoped memory for tpu_custom_call.1']
    #allocation7 [shape = 'u8[12288]{0}', space=vmem, size = 0x3000, scoped, tag = 'output window, operand 0, single buffered']
    %13 = vsyncpa [#allocation3], 0
    %14 = vsyncpa [#allocation6], 0
    %15 = vsyncpa [#allocation4], 0
    // Predicated region
    $region2: #{tpu_custom_call.1} parent=1 // pred_check
      _
    $region3: #{tpu_custom_call.1} parent=1 // pred_check_branch
      %17 = sbr.rel (0) target = $region5
    $region4: #{tpu_custom_call.1} parent=1 // pred_region
      _
    $region5: #{tpu_custom_call.1} parent=1 // pred_fallthru
      _
    // Predicated region
    $region6: #{tpu_custom_call.1} parent=1 // pred_check
      _
    $region7: #{tpu_custom_call.1} parent=1 // pred_check_branch
      %19 = sbr.rel (0) target = $region9
    $region8: #{tpu_custom_call.1} parent=1 // pred_region
      _
    $region9: #{tpu_custom_call.1} parent=1 // pred_fallthru
      _
    // Predicated region
    $region10: #{tpu_custom_call.1} parent=1 // pred_check
      _
    $region11: #{tpu_custom_call.1} parent=1 // pred_check_branch
      %21 = sbr.rel (0) target = $region13
    $region12: #{tpu_custom_call.1} parent=1 // pred_region
      _
    $region13: #{tpu_custom_call.1} parent=1 // pred_fallthru
      _
    // Predicated region
    $region14: #{tpu_custom_call.1} parent=1 // pred_check
      _
    $region15: #{tpu_custom_call.1} parent=1 // pred_check_branch
      %23 = sbr.rel (0) target = $region17
    $region16: #{tpu_custom_call.1} parent=1 // pred_region
      _
    $region17: #{tpu_custom_call.1} parent=1 // pred_fallthru
      _
    // Predicated region
    $region18: #{tpu_custom_call.1} parent=1 // pred_check
      _
    $region19: #{tpu_custom_call.1} parent=1 // pred_check_branch
      %25 = sbr.rel (0) target = $region21
    $region20: #{tpu_custom_call.1} parent=1 // pred_region
      %s27 = ssub.s32 1024, 1024
      %28 = vsyncadd [#allocation3], %s27
      %s29 = sshll.u32 [#allocation2], 4
      %s30 = int_to_ptr.vmem [resolvable:$true] %s29
      %35 = dma.hbm_to_vmem [thread:$0]  %s4, 1024, %s30, [#allocation3], 64, 64, 4
    $region21: #{tpu_custom_call.1} parent=1 // pred_fallthru
      _
    // Predicated region
    $region22: #{tpu_custom_call.1} parent=1 // pred_check
      _
    $region23: #{tpu_custom_call.1} parent=1 // pred_check_branch
      %37 = sbr.rel (0) target = $region25
    $region24: #{tpu_custom_call.1} parent=1 // pred_region
      _
    $region25: #{tpu_custom_call.1} parent=1 // pred_fallthru
      _
    // Predicated region
    $region26: #{tpu_custom_call.1} parent=1 // pred_check
      _
    $region27: #{tpu_custom_call.1} parent=1 // pred_check_branch
      %39 = sbr.rel (0) target = $region29
    $region28: #{tpu_custom_call.1} parent=1 // pred_region
      %s41 = ssub.s32 3072, 3072
      %42 = vsyncadd [#allocation6], %s41
      %s43 = sshll.u32 [#allocation5], 4
      %s44 = int_to_ptr.vmem [resolvable:$true] %s43
      %49 = dma.hbm_to_vmem [thread:$0]  %s6, 3072, %s44, [#allocation6], 192, 192, 12
    $region29: #{tpu_custom_call.1} parent=1 // pred_fallthru
      _
    // Predicated region
    $region30: #{tpu_custom_call.1} parent=1 // pred_check
      _
    $region31: #{tpu_custom_call.1} parent=1 // pred_check_branch
      %51 = sbr.rel (0) target = $region33
    $region32: #{tpu_custom_call.1} parent=1 // pred_region
      _
    $region33: #{tpu_custom_call.1} parent=1 // pred_fallthru
      _
    // Predicated region
    $region34: #{tpu_custom_call.1} parent=1 // pred_check
      _
    $region35: #{tpu_custom_call.1} parent=1 // pred_check_branch
      %53 = sbr.rel (0) target = $region37
    $region36: #{tpu_custom_call.1} parent=1 // pred_region
      %54 = dma.done [#allocation3], 1024
    $region37: #{tpu_custom_call.1} parent=1 // pred_fallthru
      _
    // Predicated region
    $region38: #{tpu_custom_call.1} parent=1 // pred_check
      _
    $region39: #{tpu_custom_call.1} parent=1 // pred_check_branch
      %56 = sbr.rel (0) target = $region41
    $region40: #{tpu_custom_call.1} parent=1 // pred_region
      %57 = dma.done [#allocation6], 3072
    $region41: #{tpu_custom_call.1} parent=1 // pred_fallthru
      _
    %v59 = vld [vmem:[%s0] sm:$0xff]
    %v60 = vld [vmem:[%s1] sm:$0xff]
    %62 = vset.pattern.permute.xlu0 0
    %63 = vperm.xlu0 %62, %v60
    %v64 = vpop.permute.xlu0 %63
    %v66 = vadd.f32 %v59, %v64
    %v67 = vand.u32 2147483647, %v66
    %vm68 = vcmp.le.f32.partialorder %v67, 0.7853982
    %vm69 = vcmp.lt.s32.totalorder %v66, 0
    %v70 = vand.u32 %v66, 2139095040
    %v71 = vshrl.u32 %v70, 23
    %v72 = vsub.s32 %v71, 127
    %v73 = vand.u32 2147483647, %v66
    %v74 = vand.u32 %v73, 8388607
    %v75 = vor.u32 %v74, 8388608
    %v76 = vsub.s32 0, %v75
    %v77 = vadd.s32 %v72, 1
    %vm78 = vcmp.gt.s32.totalorder %v77, 0
    %v79 = vsel %vm78, %v77, 0
    %v80 = vshrl.u32 %v79, 5
    %v81 = vand.u32 %v79, 31
    %v82 = vsub.s32 32, %v81
    %v83 = vshrl.u32 683565275, %v82
    %v84 = vshll.u32 683565275, %v81
    %v85 = vshrl.u32 2475754826, %v82
    %v86 = vor.u32 %v84, %v85
    %v87 = vshll.u32 2475754826, %v81
    %v88 = vshrl.u32 2131351028, %v82
    %v89 = vor.u32 %v87, %v88
    %v90 = vshll.u32 2131351028, %v81
    %v91 = vshrl.u32 2102212464, %v82
    %v92 = vor.u32 %v90, %v91
    %v93 = vshll.u32 2102212464, %v81
    %v94 = vshrl.u32 920167782, %v82
    %v95 = vor.u32 %v93, %v94
    %v96 = vshll.u32 920167782, %v81
    %v97 = vshrl.u32 1326507024, %v82
    %v98 = vor.u32 %v96, %v97
    %vm99 = vcmp.lt.s32.totalorder %v80, 1
    %vm100 = vcmp.lt.s32.totalorder %v80, 2
    %vm101 = vcmp.lt.s32.totalorder %v80, 3
    %vm102 = vcmp.lt.s32.totalorder %v80, 4
    %v103 = vsel %vm99, %v83, %v86
    %v104 = vsel %vm102, %v92, 2102212464
    %v105 = vsel %vm101, %v89, %v104
    %v106 = vsel %vm100, %v103, %v105
    %v107 = vsel %vm99, %v86, %v89
    %v108 = vsel %vm102, %v95, 920167782
    %v109 = vsel %vm101, %v92, %v108
    %v110 = vsel %vm100, %v107, %v109
    %v111 = vsel %vm99, %v89, %v92
    %v112 = vsel %vm102, %v98, 1326507024
    %v113 = vsel %vm101, %v95, %v112
    %v114 = vsel %vm100, %v111, %v113
    %v115 = vshll.u32 %v75, 8
    %v116 = vmul.u32.u64.compose %v115, %v114
    %v117 = vextract.low.u32 %v116
    %v118 = vextract.high.u32 %v116
    %v119 = vmul.u32.u64.compose %v115, %v110
    %v120 = vextract.low.u32 %v119
    %v121 = vextract.high.u32 %v119
    %v122 = vmul.u32 %v115, %v106
    %v123 = vadd.s32 %v118, %v120
    %vm124 = vc.u32 %v118, %v120
    %v125 = vadd.s32 %v121, 1
    %v126 = vsel %vm124, %v125, %v121
    %v127 = vadd.s32 %v122, %v126
    %v128 = vadd.s32 %v127, 536870912
    %v129 = vshrl.u32 %v128, 30
    %v130 = vshll.u32 %v129, 30
    %v131 = vsub.s32 %v127, %v130
    %vm132 = vcmp.lt.s32.totalorder %v131, 0
    %v133 = vsub.s32 0, %v131
    %v134 = vsel %vm132, %v133, %v131
    %v135 = vclz %v134
    %v136 = vsub.s32 %v135, 2
    %vm137 = vcmp.gt.s32.totalorder 0, %v136
    %v138 = vsel %vm137, 0, %v136
    %v139 = vsub.s32 32, %v138
    %v140 = vshll.u32 %v131, %v138
    %v141 = vshrl.u32 %v123, %v139
    %v142 = vor.u32 %v140, %v141
    %v143 = vsub.s32 4294967266, %v138
    %v144 = vadd.s32 %v143, 127
    %v145 = vshll.u32 %v144, 23
    %v146 = vor.u32 4788187, %v145
    %v147 = vand.u32 2147483647, %v146
    %v149 = vcvt.s32.f32 %v142
    %v150 = vmul.f32 %v149, %v147
    %v151 = vxor.u32 %v150, 2147483648
    %v152 = vsel %vm69, %v151, %v150
    %v153 = vsub.s32 4, %v129
    %v154 = vsel %vm69, %v153, %v129
    %v155 = vsel %vm68, %v66, %v152
    %v156 = vsel %vm68, 0, %v154
    %v157 = vcosq.f32.pop %v155
    %v158 = vsinq.f32.pop %v155
    %vm159 = vweird.f32 %v66
    %v160 = vand.u32 %v156, 3
    %vm161 = vcmp.lt.s32.totalorder %v160, 2
    %vm162 = vcmp.eq.s32.totalorder %v160, 0
    %v163 = vxor.u32 %v158, 2147483648
    %v164 = vsel %vm162, %v157, %v163
    %vm165 = vcmp.eq.s32.totalorder %v160, 2
    %v166 = vxor.u32 %v157, 2147483648
    %v167 = vsel %vm165, %v166, %v158
    %v168 = vsel %vm161, %v164, %v167
    %v169 = vsel %vm159, nan, %v168
    %v170 = vand.u32 2147483647, %v66
    %vm171 = vcmp.le.f32.partialorder %v170, 0.7853982
    %vm172 = vcmp.lt.s32.totalorder %v66, 0
    %v173 = vand.u32 %v66, 2139095040
    %v174 = vshrl.u32 %v173, 23
    %v175 = vsub.s32 %v174, 127
    %v176 = vand.u32 2147483647, %v66
    %v177 = vand.u32 %v176, 8388607
    %v178 = vor.u32 %v177, 8388608
    %v179 = vsub.s32 0, %v178
    %v180 = vadd.s32 %v175, 1
    %vm181 = vcmp.gt.s32.totalorder %v180, 0
    %v182 = vsel %vm181, %v180, 0
    %v183 = vshrl.u32 %v182, 5
    %v184 = vand.u32 %v182, 31
    %v185 = vsub.s32 32, %v184
    %v186 = vshrl.u32 683565275, %v185
    %v187 = vshll.u32 683565275, %v184
    %v188 = vshrl.u32 2475754826, %v185
    %v189 = vor.u32 %v187, %v188
    %v190 = vshll.u32 2475754826, %v184
    %v191 = vshrl.u32 2131351028, %v185
    %v192 = vor.u32 %v190, %v191
    %v193 = vshll.u32 2131351028, %v184
    %v194 = vshrl.u32 2102212464, %v185
    %v195 = vor.u32 %v193, %v194
    %v196 = vshll.u32 2102212464, %v184
    %v197 = vshrl.u32 920167782, %v185
    %v198 = vor.u32 %v196, %v197
    %v199 = vshll.u32 920167782, %v184
    %v200 = vshrl.u32 1326507024, %v185
    %v201 = vor.u32 %v199, %v200
    %vm202 = vcmp.lt.s32.totalorder %v183, 1
    %vm203 = vcmp.lt.s32.totalorder %v183, 2
    %vm204 = vcmp.lt.s32.totalorder %v183, 3
    %vm205 = vcmp.lt.s32.totalorder %v183, 4
    %v206 = vsel %vm202, %v186, %v189
    %v207 = vsel %vm205, %v195, 2102212464
    %v208 = vsel %vm204, %v192, %v207
    %v209 = vsel %vm203, %v206, %v208
    %v210 = vsel %vm202, %v189, %v192
    %v211 = vsel %vm205, %v198, 920167782
    %v212 = vsel %vm204, %v195, %v211
    %v213 = vsel %vm203, %v210, %v212
    %v214 = vsel %vm202, %v192, %v195
    %v215 = vsel %vm205, %v201, 1326507024
    %v216 = vsel %vm204, %v198, %v215
    %v217 = vsel %vm203, %v214, %v216
    %v218 = vshll.u32 %v178, 8
    %v219 = vmul.u32.u64.compose %v218, %v217
    %v220 = vextract.low.u32 %v219
    %v221 = vextract.high.u32 %v219
    %v222 = vmul.u32.u64.compose %v218, %v213
    %v223 = vextract.low.u32 %v222
    %v224 = vextract.high.u32 %v222
    %v225 = vmul.u32 %v218, %v209
    %v226 = vadd.s32 %v221, %v223
    %vm227 = vc.u32 %v221, %v223
    %v228 = vadd.s32 %v224, 1
    %v229 = vsel %vm227, %v228, %v224
    %v230 = vadd.s32 %v225, %v229
    %v231 = vadd.s32 %v230, 536870912
    %v232 = vshrl.u32 %v231, 30
    %v233 = vshll.u32 %v232, 30
    %v234 = vsub.s32 %v230, %v233
    %vm235 = vcmp.lt.s32.totalorder %v234, 0
    %v236 = vsub.s32 0, %v234
    %v237 = vsel %vm235, %v236, %v234
    %v238 = vclz %v237
    %v239 = vsub.s32 %v238, 2
    %vm240 = vcmp.gt.s32.totalorder 0, %v239
    %v241 = vsel %vm240, 0, %v239
    %v242 = vsub.s32 32, %v241
    %v243 = vshll.u32 %v234, %v241
    %v244 = vshrl.u32 %v226, %v242
    %v245 = vor.u32 %v243, %v244
    %v246 = vsub.s32 4294967266, %v241
    %v247 = vadd.s32 %v246, 127
    %v248 = vshll.u32 %v247, 23
    %v249 = vor.u32 4788187, %v248
    %v250 = vand.u32 2147483647, %v249
    %v252 = vcvt.s32.f32 %v245
    %v253 = vmul.f32 %v252, %v250
    %v254 = vxor.u32 %v253, 2147483648
    %v255 = vsel %vm172, %v254, %v253
    %v256 = vsub.s32 4, %v232
    %v257 = vsel %vm172, %v256, %v232
    %v258 = vsel %vm171, %v66, %v255
    %v259 = vsel %vm171, 0, %v257
    %v260 = vcosq.f32.pop %v258
    %v261 = vsinq.f32.pop %v258
    %vm262 = vweird.f32 %v66
    %v263 = vadd.s32 %v259, 3
    %v264 = vand.u32 %v263, 3
    %vm265 = vcmp.lt.s32.totalorder %v264, 2
    %vm266 = vcmp.eq.s32.totalorder %v264, 0
    %v267 = vxor.u32 %v261, 2147483648
    %v268 = vsel %vm266, %v260, %v267
    %vm269 = vcmp.eq.s32.totalorder %v264, 2
    %v270 = vxor.u32 %v260, 2147483648
    %v271 = vsel %vm269, %v270, %v261
    %v272 = vsel %vm265, %v268, %v271
    %v273 = vsel %vm262, nan, %v272
    %v274 = vrot.slane %v273, 7
    %v275 = vadd.f32 %v169, %v274
    %276 = vset.pattern.permute.xlu0 1
    %277 = vperm.xlu0 %276, %v60
    %v278 = vpop.permute.xlu0 %277
    %v280 = vadd.f32 %v275, %v278
    %v281 = vand.u32 2147483647, %v280
    %vm282 = vcmp.le.f32.partialorder %v281, 0.7853982
    %vm283 = vcmp.lt.s32.totalorder %v280, 0
    %v284 = vand.u32 %v280, 2139095040
    %v285 = vshrl.u32 %v284, 23
    %v286 = vsub.s32 %v285, 127
    %v287 = vand.u32 2147483647, %v280
    %v288 = vand.u32 %v287, 8388607
    %v289 = vor.u32 %v288, 8388608
    %v290 = vsub.s32 0, %v289
    %v291 = vadd.s32 %v286, 1
    %vm292 = vcmp.gt.s32.totalorder %v291, 0
    %v293 = vsel %vm292, %v291, 0
    %v294 = vshrl.u32 %v293, 5
    %v295 = vand.u32 %v293, 31
    %v296 = vsub.s32 32, %v295
    %v297 = vshrl.u32 683565275, %v296
    %v298 = vshll.u32 683565275, %v295
    %v299 = vshrl.u32 2475754826, %v296
    %v300 = vor.u32 %v298, %v299
    %v301 = vshll.u32 2475754826, %v295
    %v302 = vshrl.u32 2131351028, %v296
    %v303 = vor.u32 %v301, %v302
    %v304 = vshll.u32 2131351028, %v295
    %v305 = vshrl.u32 2102212464, %v296
    %v306 = vor.u32 %v304, %v305
    %v307 = vshll.u32 2102212464, %v295
    %v308 = vshrl.u32 920167782, %v296
    %v309 = vor.u32 %v307, %v308
    %v310 = vshll.u32 920167782, %v295
    %v311 = vshrl.u32 1326507024, %v296
    %v312 = vor.u32 %v310, %v311
    %vm313 = vcmp.lt.s32.totalorder %v294, 1
    %vm314 = vcmp.lt.s32.totalorder %v294, 2
    %vm315 = vcmp.lt.s32.totalorder %v294, 3
    %vm316 = vcmp.lt.s32.totalorder %v294, 4
    %v317 = vsel %vm313, %v297, %v300
    %v318 = vsel %vm316, %v306, 2102212464
    %v319 = vsel %vm315, %v303, %v318
    %v320 = vsel %vm314, %v317, %v319
    %v321 = vsel %vm313, %v300, %v303
    %v322 = vsel %vm316, %v309, 920167782
    %v323 = vsel %vm315, %v306, %v322
    %v324 = vsel %vm314, %v321, %v323
    %v325 = vsel %vm313, %v303, %v306
    %v326 = vsel %vm316, %v312, 1326507024
    %v327 = vsel %vm315, %v309, %v326
    %v328 = vsel %vm314, %v325, %v327
    %v329 = vshll.u32 %v289, 8
    %v330 = vmul.u32.u64.compose %v329, %v328
    %v331 = vextract.low.u32 %v330
    %v332 = vextract.high.u32 %v330
    %v333 = vmul.u32.u64.compose %v329, %v324
    %v334 = vextract.low.u32 %v333
    %v335 = vextract.high.u32 %v333
    %v336 = vmul.u32 %v329, %v320
    %v337 = vadd.s32 %v332, %v334
    %vm338 = vc.u32 %v332, %v334
    %v339 = vadd.s32 %v335, 1
    %v340 = vsel %vm338, %v339, %v335
    %v341 = vadd.s32 %v336, %v340
    %v342 = vadd.s32 %v341, 536870912
    %v343 = vshrl.u32 %v342, 30
    %v344 = vshll.u32 %v343, 30
    %v345 = vsub.s32 %v341, %v344
    %vm346 = vcmp.lt.s32.totalorder %v345, 0
    %v347 = vsub.s32 0, %v345
    %v348 = vsel %vm346, %v347, %v345
    %v349 = vclz %v348
    %v350 = vsub.s32 %v349, 2
    %vm351 = vcmp.gt.s32.totalorder 0, %v350
    %v352 = vsel %vm351, 0, %v350
    %v353 = vsub.s32 32, %v352
    %v354 = vshll.u32 %v345, %v352
    %v355 = vshrl.u32 %v337, %v353
    %v356 = vor.u32 %v354, %v355
    %v357 = vsub.s32 4294967266, %v352
    %v358 = vadd.s32 %v357, 127
    %v359 = vshll.u32 %v358, 23
    %v360 = vor.u32 4788187, %v359
    %v361 = vand.u32 2147483647, %v360
    %v363 = vcvt.s32.f32 %v356
    %v364 = vmul.f32 %v363, %v361
    %v365 = vxor.u32 %v364, 2147483648
    %v366 = vsel %vm283, %v365, %v364
    %v367 = vsub.s32 4, %v343
    %v368 = vsel %vm283, %v367, %v343
    %v369 = vsel %vm282, %v280, %v366
    %v370 = vsel %vm282, 0, %v368
    %v371 = vcosq.f32.pop %v369
    %v372 = vsinq.f32.pop %v369
    %vm373 = vweird.f32 %v280
    %v374 = vand.u32 %v370, 3
    %vm375 = vcmp.lt.s32.totalorder %v374, 2
    %vm376 = vcmp.eq.s32.totalorder %v374, 0
    %v377 = vxor.u32 %v372, 2147483648
    %v378 = vsel %vm376, %v371, %v377
    %vm379 = vcmp.eq.s32.totalorder %v374, 2
    %v380 = vxor.u32 %v371, 2147483648
    %v381 = vsel %vm379, %v380, %v372
    %v382 = vsel %vm375, %v378, %v381
    %v383 = vsel %vm373, nan, %v382
    %v384 = vand.u32 2147483647, %v280
    %vm385 = vcmp.le.f32.partialorder %v384, 0.7853982
    %vm386 = vcmp.lt.s32.totalorder %v280, 0
    %v387 = vand.u32 %v280, 2139095040
    %v388 = vshrl.u32 %v387, 23
    %v389 = vsub.s32 %v388, 127
    %v390 = vand.u32 2147483647, %v280
    %v391 = vand.u32 %v390, 8388607
    %v392 = vor.u32 %v391, 8388608
    %v393 = vsub.s32 0, %v392
    %v394 = vadd.s32 %v389, 1
    %vm395 = vcmp.gt.s32.totalorder %v394, 0
    %v396 = vsel %vm395, %v394, 0
    %v397 = vshrl.u32 %v396, 5
    %v398 = vand.u32 %v396, 31
    %v399 = vsub.s32 32, %v398
    %v400 = vshrl.u32 683565275, %v399
    %v401 = vshll.u32 683565275, %v398
    %v402 = vshrl.u32 2475754826, %v399
    %v403 = vor.u32 %v401, %v402
    %v404 = vshll.u32 2475754826, %v398
    %v405 = vshrl.u32 2131351028, %v399
    %v406 = vor.u32 %v404, %v405
    %v407 = vshll.u32 2131351028, %v398
    %v408 = vshrl.u32 2102212464, %v399
    %v409 = vor.u32 %v407, %v408
    %v410 = vshll.u32 2102212464, %v398
    %v411 = vshrl.u32 920167782, %v399
    %v412 = vor.u32 %v410, %v411
    %v413 = vshll.u32 920167782, %v398
    %v414 = vshrl.u32 1326507024, %v399
    %v415 = vor.u32 %v413, %v414
    %vm416 = vcmp.lt.s32.totalorder %v397, 1
    %vm417 = vcmp.lt.s32.totalorder %v397, 2
    %vm418 = vcmp.lt.s32.totalorder %v397, 3
    %vm419 = vcmp.lt.s32.totalorder %v397, 4
    %v420 = vsel %vm416, %v400, %v403
    %v421 = vsel %vm419, %v409, 2102212464
    %v422 = vsel %vm418, %v406, %v421
    %v423 = vsel %vm417, %v420, %v422
    %v424 = vsel %vm416, %v403, %v406
    %v425 = vsel %vm419, %v412, 920167782
    %v426 = vsel %vm418, %v409, %v425
    %v427 = vsel %vm417, %v424, %v426
    %v428 = vsel %vm416, %v406, %v409
    %v429 = vsel %vm419, %v415, 1326507024
    %v430 = vsel %vm418, %v412, %v429
    %v431 = vsel %vm417, %v428, %v430
    %v432 = vshll.u32 %v392, 8
    %v433 = vmul.u32.u64.compose %v432, %v431
    %v434 = vextract.low.u32 %v433
    %v435 = vextract.high.u32 %v433
    %v436 = vmul.u32.u64.compose %v432, %v427
    %v437 = vextract.low.u32 %v436
    %v438 = vextract.high.u32 %v436
    %v439 = vmul.u32 %v432, %v423
    %v440 = vadd.s32 %v435, %v437
    %vm441 = vc.u32 %v435, %v437
    %v442 = vadd.s32 %v438, 1
    %v443 = vsel %vm441, %v442, %v438
    %v444 = vadd.s32 %v439, %v443
    %v445 = vadd.s32 %v444, 536870912
    %v446 = vshrl.u32 %v445, 30
    %v447 = vshll.u32 %v446, 30
    %v448 = vsub.s32 %v444, %v447
    %vm449 = vcmp.lt.s32.totalorder %v448, 0
    %v450 = vsub.s32 0, %v448
    %v451 = vsel %vm449, %v450, %v448
    %v452 = vclz %v451
    %v453 = vsub.s32 %v452, 2
    %vm454 = vcmp.gt.s32.totalorder 0, %v453
    %v455 = vsel %vm454, 0, %v453
    %v456 = vsub.s32 32, %v455
    %v457 = vshll.u32 %v448, %v455
    %v458 = vshrl.u32 %v440, %v456
    %v459 = vor.u32 %v457, %v458
    %v460 = vsub.s32 4294967266, %v455
    %v461 = vadd.s32 %v460, 127
    %v462 = vshll.u32 %v461, 23
    %v463 = vor.u32 4788187, %v462
    %v464 = vand.u32 2147483647, %v463
    %v466 = vcvt.s32.f32 %v459
    %v467 = vmul.f32 %v466, %v464
    %v468 = vxor.u32 %v467, 2147483648
    %v469 = vsel %vm386, %v468, %v467
    %v470 = vsub.s32 4, %v446
    %v471 = vsel %vm386, %v470, %v446
    %v472 = vsel %vm385, %v280, %v469
    %v473 = vsel %vm385, 0, %v471
    %v474 = vcosq.f32.pop %v472
    %v475 = vsinq.f32.pop %v472
    %vm476 = vweird.f32 %v280
    %v477 = vadd.s32 %v473, 3
    %v478 = vand.u32 %v477, 3
    %vm479 = vcmp.lt.s32.totalorder %v478, 2
    %vm480 = vcmp.eq.s32.totalorder %v478, 0
    %v481 = vxor.u32 %v475, 2147483648
    %v482 = vsel %vm480, %v474, %v481
    %vm483 = vcmp.eq.s32.totalorder %v478, 2
    %v484 = vxor.u32 %v474, 2147483648
    %v485 = vsel %vm483, %v484, %v475
    %v486 = vsel %vm479, %v482, %v485
    %v487 = vsel %vm476, nan, %v486
    %v488 = vrot.slane %v487, 7
    %v489 = vadd.f32 %v383, %v488
    %v490 = vand.u32 2147483647, %v489
    %vm491 = vcmp.le.f32.partialorder %v490, 0.7853982
    %vm492 = vcmp.lt.s32.totalorder %v489, 0
    %v493 = vand.u32 %v489, 2139095040
    %v494 = vshrl.u32 %v493, 23
    %v495 = vsub.s32 %v494, 127
    %v496 = vand.u32 2147483647, %v489
    %v497 = vand.u32 %v496, 8388607
    %v498 = vor.u32 %v497, 8388608
    %v499 = vsub.s32 0, %v498
    %v500 = vadd.s32 %v495, 1
    %vm501 = vcmp.gt.s32.totalorder %v500, 0
    %v502 = vsel %vm501, %v500, 0
    %v503 = vshrl.u32 %v502, 5
    %v504 = vand.u32 %v502, 31
    %v505 = vsub.s32 32, %v504
    %v506 = vshrl.u32 683565275, %v505
    %v507 = vshll.u32 683565275, %v504
    %v508 = vshrl.u32 2475754826, %v505
    %v509 = vor.u32 %v507, %v508
    %v510 = vshll.u32 2475754826, %v504
    %v511 = vshrl.u32 2131351028, %v505
    %v512 = vor.u32 %v510, %v511
    %v513 = vshll.u32 2131351028, %v504
    %v514 = vshrl.u32 2102212464, %v505
    %v515 = vor.u32 %v513, %v514
    %v516 = vshll.u32 2102212464, %v504
    %v517 = vshrl.u32 920167782, %v505
    %v518 = vor.u32 %v516, %v517
    %v519 = vshll.u32 920167782, %v504
    %v520 = vshrl.u32 1326507024, %v505
    %v521 = vor.u32 %v519, %v520
    %vm522 = vcmp.lt.s32.totalorder %v503, 1
    %vm523 = vcmp.lt.s32.totalorder %v503, 2
    %vm524 = vcmp.lt.s32.totalorder %v503, 3
    %vm525 = vcmp.lt.s32.totalorder %v503, 4
    %v526 = vsel %vm522, %v506, %v509
    %v527 = vsel %vm525, %v515, 2102212464
    %v528 = vsel %vm524, %v512, %v527
    %v529 = vsel %vm523, %v526, %v528
    %v530 = vsel %vm522, %v509, %v512
    %v531 = vsel %vm525, %v518, 920167782
    %v532 = vsel %vm524, %v515, %v531
    %v533 = vsel %vm523, %v530, %v532
    %v534 = vsel %vm522, %v512, %v515
    %v535 = vsel %vm525, %v521, 1326507024
    %v536 = vsel %vm524, %v518, %v535
    %v537 = vsel %vm523, %v534, %v536
    %v538 = vshll.u32 %v498, 8
    %v539 = vmul.u32.u64.compose %v538, %v537
    %v540 = vextract.low.u32 %v539
    %v541 = vextract.high.u32 %v539
    %v542 = vmul.u32.u64.compose %v538, %v533
    %v543 = vextract.low.u32 %v542
    %v544 = vextract.high.u32 %v542
    %v545 = vmul.u32 %v538, %v529
    %v546 = vadd.s32 %v541, %v543
    %vm547 = vc.u32 %v541, %v543
    %v548 = vadd.s32 %v544, 1
    %v549 = vsel %vm547, %v548, %v544
    %v550 = vadd.s32 %v545, %v549
    %v551 = vadd.s32 %v550, 536870912
    %v552 = vshrl.u32 %v551, 30
    %v553 = vshll.u32 %v552, 30
    %v554 = vsub.s32 %v550, %v553
    %vm555 = vcmp.lt.s32.totalorder %v554, 0
    %v556 = vsub.s32 0, %v554
    %v557 = vsel %vm555, %v556, %v554
    %v558 = vclz %v557
    %v559 = vsub.s32 %v558, 2
    %vm560 = vcmp.gt.s32.totalorder 0, %v559
    %v561 = vsel %vm560, 0, %v559
    %v562 = vsub.s32 32, %v561
    %v563 = vshll.u32 %v554, %v561
    %v564 = vshrl.u32 %v546, %v562
    %v565 = vor.u32 %v563, %v564
    %v566 = vsub.s32 4294967266, %v561
    %v567 = vadd.s32 %v566, 127
    %v568 = vshll.u32 %v567, 23
    %v569 = vor.u32 4788187, %v568
    %v570 = vand.u32 2147483647, %v569
    %v572 = vcvt.s32.f32 %v565
    %v573 = vmul.f32 %v572, %v570
    %v574 = vxor.u32 %v573, 2147483648
    %v575 = vsel %vm492, %v574, %v573
    %v576 = vsub.s32 4, %v552
    %v577 = vsel %vm492, %v576, %v552
    %v578 = vsel %vm491, %v489, %v575
    %v579 = vsel %vm491, 0, %v577
    %v580 = vcosq.f32.pop %v578
    %v581 = vsinq.f32.pop %v578
    %vm582 = vweird.f32 %v489
    %v583 = vand.u32 %v579, 3
    %vm584 = vcmp.lt.s32.totalorder %v583, 2
    %vm585 = vcmp.eq.s32.totalorder %v583, 0
    %v586 = vxor.u32 %v581, 2147483648
    %v587 = vsel %vm585, %v580, %v586
    %vm588 = vcmp.eq.s32.totalorder %v583, 2
    %v589 = vxor.u32 %v580, 2147483648
    %v590 = vsel %vm588, %v589, %v581
    %v591 = vsel %vm584, %v587, %v590
    %v592 = vsel %vm582, nan, %v591
    %v593 = vmul.f32 %v592, %v592
    %vm594 = vcmask 64512
    %v595 = vsel %vm594, %v593, 0.0
    %v596 = vrot.slane %v595, 4
    %v597 = vadd.f32 %v595, %v596
    %v598 = vrot.slane %v597, 2
    %v599 = vadd.f32 %v597, %v598
    %v600 = vrot.slane %v599, 1
    %v601 = vadd.f32 %v599, %v600
    %v602 = vadd.f32 %v601, 1e-06
    %v603 = vrcp.pop %v602
    %v604 = vmul.f32 %v593, %v603
    %v605 = vld [vmem:[%s2] sm:$0xf]
    %v606 = vld [vmem:[%s3] sm:$0x1]
    %v607 = vpack.c.bf16 %v604, %v604
    %v609 = vlaneseq
    %v610 = vshrl.u32 %v609, 7
    %v611 = vsub.s32 0, %v610
    %v612 = vrot.slane %v606, %v611
    %614 = vxpose.xlu0.c.b16.start [1/8] %v607, 128
    %615 = vxpose.xlu0.c.b16.cont [2/8] 0, 128
    %616 = vxpose.xlu0.c.b16.cont [3/8] 0, 128
    %617 = vxpose.xlu0.c.b16.cont [4/8] 0, 128
    %618 = vxpose.xlu0.c.b16.cont [5/8] 0, 128
    %619 = vxpose.xlu0.c.b16.cont [6/8] 0, 128
    %620 = vxpose.xlu0.c.b16.cont [7/8] 0, 128
    %621 = vxpose.xlu0.c.b16.end [8/8] 0, 128
    %v622 = vpop.trf.xlu0
    %v623 = vpop.trf.xlu0
    %v624 = vpop.trf.xlu0
    %v625 = vpop.trf.xlu0
    %v626 = vpop.trf.xlu0
    %v627 = vpop.trf.xlu0
    %v628 = vpop.trf.xlu0
    %v629 = vpop.trf.xlu0
    %v631 = vsel %vm594, %v622, 0
    %vm633 = vcmask 1043456
    %v635 = vsel %vm633, %v605, 0
    %637 = vmatprep.subr.bf16.mxu0 0
    %638 = vmatpush1.bf16.msra.mxu0 %v635
    %639 = vmatprep.subr.bf16.mxu0 0
    %640 = vmatpush1.bf16.msra.mxu0 0
    %641 = vmatprep.subr.bf16.mxu0 0
    %642 = vmatpush1.bf16.msra.mxu0 0
    %643 = vmatprep.subr.bf16.mxu0 0
    %644 = vmatpush1.bf16.msra.mxu0 0
    %645 = vmatprep.subr.bf16.mxu0 0
    %646 = vmatpush1.bf16.msra.mxu0 0
    %647 = vmatprep.subr.bf16.mxu0 0
    %648 = vmatpush1.bf16.msra.mxu0 0
    %649 = vmatprep.subr.bf16.mxu0 0
    %650 = vmatpush1.bf16.msra.mxu0 0
    %651 = vmatprep.subr.bf16.mxu0 0
    %652 = vmatpush1.bf16.msra.mxu0 0
    %653 = vmatprep.subr.bf16.mxu0 0
    %654 = vmatpush1.bf16.msra.mxu0 0
    %655 = vmatprep.subr.bf16.mxu0 0
    %656 = vmatpush1.bf16.msra.mxu0 0
    %657 = vmatprep.subr.bf16.mxu0 0
    %658 = vmatpush1.bf16.msra.mxu0 0
    %659 = vmatprep.subr.bf16.mxu0 0
    %660 = vmatpush1.bf16.msra.mxu0 0
    %661 = vmatprep.subr.bf16.mxu0 0
    %662 = vmatpush1.bf16.msra.mxu0 0
    %663 = vmatprep.subr.bf16.mxu0 0
    %664 = vmatpush1.bf16.msra.mxu0 0
    %665 = vmatprep.subr.bf16.mxu0 0
    %666 = vmatpush1.bf16.msra.mxu0 0
    %667 = vmatprep.subr.bf16.mxu0 0
    %668 = vmatpush1.bf16.msra.mxu0 0
    %669 = vmatprep.mubr.bf16.mxu0 0
    %670 = vmatmul.mubr.bf16.gmra.mrb[0].mxu0 %v631
    %v671 = vpop.f32.mrb[0].mxu0
    %v672 = vadd.f32 %v612, %v671
    %v673 = vpop.f32.mrb[0].mxu0
    %v674 = vpop.f32.mrb[0].mxu0
    %v675 = vpop.f32.mrb[0].mxu0
    %676 = vdwg.mxu0
    %v677 = vtanh.pop %v672
    %v678 = vld [vmem:[#allocation2] sm:$0xf]
    %v679 = vld [vmem:[#allocation2 + $0x4] sm:$0xf]
    %v680 = vld [vmem:[#allocation2 + $0x8] sm:$0xf]
    %v681 = vld [vmem:[#allocation2 + $0xc] sm:$0xf]
    %v682 = vld [vmem:[#allocation2 + $0x10] sm:$0xf]
    %v683 = vld [vmem:[#allocation2 + $0x14] sm:$0xf]
    %v684 = vld [vmem:[#allocation2 + $0x18] sm:$0xf]
    %v685 = vld [vmem:[#allocation2 + $0x1c] sm:$0xf]
    %v686 = vld [vmem:[#allocation2 + $0x20] sm:$0xf]
    %v687 = vld [vmem:[#allocation2 + $0x24] sm:$0xf]
    %v688 = vld [vmem:[#allocation2 + $0x28] sm:$0xf]
    %v689 = vld [vmem:[#allocation2 + $0x2c] sm:$0xf]
    %v690 = vld [vmem:[#allocation2 + $0x30] sm:$0xf]
    %v691 = vld [vmem:[#allocation2 + $0x34] sm:$0xf]
    %v692 = vld [vmem:[#allocation2 + $0x38] sm:$0xf]
    %v693 = vld [vmem:[#allocation2 + $0x3c] sm:$0xf]
    %v694 = vld [vmem:[%s5] sm:$0x1]
    %v695 = vpack.c.bf16 %v677, %v677
    %v697 = vlaneseq
    %v698 = vshrl.u32 %v697, 7
    %v699 = vsub.s32 0, %v698
    %v700 = vrot.slane %v694, %v699
    %v718 = vunpack.c.l.b16 %v678
    %v719 = vunpack.c.l.b16 %v679
    %v720 = vunpack.c.l.b16 %v680
    %v721 = vunpack.c.l.b16 %v681
    %v722 = vunpack.c.l.b16 %v682
    %v723 = vunpack.c.l.b16 %v683
    %v724 = vunpack.c.l.b16 %v684
    %v725 = vunpack.c.l.b16 %v685
    %v726 = vunpack.c.l.b16 %v686
    %v727 = vunpack.c.l.b16 %v687
    %v728 = vunpack.c.l.b16 %v688
    %v729 = vunpack.c.l.b16 %v689
    %v730 = vunpack.c.l.b16 %v690
    %v731 = vunpack.c.l.b16 %v691
    %v732 = vunpack.c.l.b16 %v692
    %v733 = vunpack.c.l.b16 %v693
    %v734 = vpack.c.b16 %v719, %v718
    %v735 = vpack.c.b16 %v721, %v720
    %v736 = vpack.c.b16 %v723, %v722
    %v737 = vpack.c.b16 %v725, %v724
    %v738 = vpack.c.b16 %v727, %v726
    %v739 = vpack.c.b16 %v729, %v728
    %v740 = vpack.c.b16 %v731, %v730
    %v741 = vpack.c.b16 %v733, %v732
    %750 = vmatprep.subr.bf16.mxu0 0
    %751 = vmatpush1.bf16.msra.mxu0 %v734
    %752 = vmatprep.subr.bf16.mxu0 0
    %753 = vmatpush1.bf16.msra.mxu0 %v735
    %754 = vmatprep.subr.bf16.mxu0 0
    %755 = vmatpush1.bf16.msra.mxu0 %v736
    %756 = vmatprep.subr.bf16.mxu0 0
    %757 = vmatpush1.bf16.msra.mxu0 %v737
    %758 = vmatprep.subr.bf16.mxu0 0
    %759 = vmatpush1.bf16.msra.mxu0 %v738
    %760 = vmatprep.subr.bf16.mxu0 0
    %761 = vmatpush1.bf16.msra.mxu0 %v739
    %762 = vmatprep.subr.bf16.mxu0 0
    %763 = vmatpush1.bf16.msra.mxu0 %v740
    %764 = vmatprep.subr.bf16.mxu0 0
    %765 = vmatpush1.bf16.msra.mxu0 %v741
    %766 = vmatprep.subr.bf16.mxu0 0
    %767 = vmatpush1.bf16.msra.mxu0 0
    %768 = vmatprep.subr.bf16.mxu0 0
    %769 = vmatpush1.bf16.msra.mxu0 0
    %770 = vmatprep.subr.bf16.mxu0 0
    %771 = vmatpush1.bf16.msra.mxu0 0
    %772 = vmatprep.subr.bf16.mxu0 0
    %773 = vmatpush1.bf16.msra.mxu0 0
    %774 = vmatprep.subr.bf16.mxu0 0
    %775 = vmatpush1.bf16.msra.mxu0 0
    %776 = vmatprep.subr.bf16.mxu0 0
    %777 = vmatpush1.bf16.msra.mxu0 0
    %778 = vmatprep.subr.bf16.mxu0 0
    %779 = vmatpush1.bf16.msra.mxu0 0
    %780 = vmatprep.subr.bf16.mxu0 0
    %781 = vmatpush1.bf16.msra.mxu0 0
    %782 = vmatprep.mubr.bf16.mxu0 0
    %783 = vmatmul.mubr.bf16.gmra.mrb[0].mxu0 %v695
    %v784 = vpop.f32.mrb[0].mxu0
    %v785 = vadd.f32 %v700, %v784
    %v786 = vpop.f32.mrb[0].mxu0
    %v787 = vpop.f32.mrb[0].mxu0
    %v788 = vpop.f32.mrb[0].mxu0
    %789 = vdwg.mxu0
    %v790 = vtanh.pop %v785
    %v791 = vld [vmem:[#allocation5] sm:$0xff]
    %v792 = vld [vmem:[#allocation5 + $0x8] sm:$0xf]
    %v793 = vld [vmem:[#allocation5 + $0xc] sm:$0xff]
    %v794 = vld [vmem:[#allocation5 + $0x14] sm:$0xf]
    %v795 = vld [vmem:[#allocation5 + $0x18] sm:$0xff]
    %v796 = vld [vmem:[#allocation5 + $0x20] sm:$0xf]
    %v797 = vld [vmem:[#allocation5 + $0x24] sm:$0xff]
    %v798 = vld [vmem:[#allocation5 + $0x2c] sm:$0xf]
    %v799 = vld [vmem:[#allocation5 + $0x30] sm:$0xff]
    %v800 = vld [vmem:[#allocation5 + $0x38] sm:$0xf]
    %v801 = vld [vmem:[#allocation5 + $0x3c] sm:$0xff]
    %v802 = vld [vmem:[#allocation5 + $0x44] sm:$0xf]
    %v803 = vld [vmem:[#allocation5 + $0x48] sm:$0xff]
    %v804 = vld [vmem:[#allocation5 + $0x50] sm:$0xf]
    %v805 = vld [vmem:[#allocation5 + $0x54] sm:$0xff]
    %v806 = vld [vmem:[#allocation5 + $0x5c] sm:$0xf]
    %v807 = vld [vmem:[#allocation5 + $0x60] sm:$0xff]
    %v808 = vld [vmem:[#allocation5 + $0x68] sm:$0xf]
    %v809 = vld [vmem:[#allocation5 + $0x6c] sm:$0xff]
    %v810 = vld [vmem:[#allocation5 + $0x74] sm:$0xf]
    %v811 = vld [vmem:[#allocation5 + $0x78] sm:$0xff]
    %v812 = vld [vmem:[#allocation5 + $0x80] sm:$0xf]
    %v813 = vld [vmem:[#allocation5 + $0x84] sm:$0xff]
    %v814 = vld [vmem:[#allocation5 + $0x8c] sm:$0xf]
    %v815 = vld [vmem:[#allocation5 + $0x90] sm:$0xff]
    %v816 = vld [vmem:[#allocation5 + $0x98] sm:$0xf]
    %v817 = vld [vmem:[#allocation5 + $0x9c] sm:$0xff]
    %v818 = vld [vmem:[#allocation5 + $0xa4] sm:$0xf]
    %v819 = vld [vmem:[#allocation5 + $0xa8] sm:$0xff]
    %v820 = vld [vmem:[#allocation5 + $0xb0] sm:$0xf]
    %v821 = vld [vmem:[#allocation5 + $0xb4] sm:$0xff]
    %v822 = vld [vmem:[#allocation5 + $0xbc] sm:$0xf]
    %v823 = vpack.c.bf16 %v790, %v790
    %v824 = vld [vmem:[%s7] sm:$0x7]
    %v826 = vlaneseq
    %v827 = vshrl.u32 %v826, 7
    %v828 = vsub.s32 0, %v827
    %v829 = vrot.slane %v824, %v828
    %v830 = vlaneseq
    %v831 = vshrl.u32 %v830, 7
    %v832 = vsub.s32 1, %v831
    %v833 = vrot.slane %v824, %v832
    %v834 = vlaneseq
    %v835 = vshrl.u32 %v834, 7
    %v836 = vsub.s32 2, %v835
    %v837 = vrot.slane %v824, %v836
    %v873 = vunpack.c.l.b16 %v791
    %v874 = vunpack.c.h.b16 %v791
    %v875 = vunpack.c.l.b16 %v792
    %v876 = vunpack.c.l.b16 %v793
    %v877 = vunpack.c.h.b16 %v793
    %v878 = vunpack.c.l.b16 %v794
    %v879 = vunpack.c.l.b16 %v795
    %v880 = vunpack.c.h.b16 %v795
    %v881 = vunpack.c.l.b16 %v796
    %v882 = vunpack.c.l.b16 %v797
    %v883 = vunpack.c.h.b16 %v797
    %v884 = vunpack.c.l.b16 %v798
    %v885 = vunpack.c.l.b16 %v799
    %v886 = vunpack.c.h.b16 %v799
    %v887 = vunpack.c.l.b16 %v800
    %v888 = vunpack.c.l.b16 %v801
    %v889 = vunpack.c.h.b16 %v801
    %v890 = vunpack.c.l.b16 %v802
    %v891 = vunpack.c.l.b16 %v803
    %v892 = vunpack.c.h.b16 %v803
    %v893 = vunpack.c.l.b16 %v804
    %v894 = vunpack.c.l.b16 %v805
    %v895 = vunpack.c.h.b16 %v805
    %v896 = vunpack.c.l.b16 %v806
    %v897 = vunpack.c.l.b16 %v807
    %v898 = vunpack.c.h.b16 %v807
    %v899 = vunpack.c.l.b16 %v808
    %v900 = vunpack.c.l.b16 %v809
    %v901 = vunpack.c.h.b16 %v809
    %v902 = vunpack.c.l.b16 %v810
    %v903 = vunpack.c.l.b16 %v811
    %v904 = vunpack.c.h.b16 %v811
    %v905 = vunpack.c.l.b16 %v812
    %v906 = vunpack.c.l.b16 %v813
    %v907 = vunpack.c.h.b16 %v813
    %v908 = vunpack.c.l.b16 %v814
    %v909 = vunpack.c.l.b16 %v815
    %v910 = vunpack.c.h.b16 %v815
    %v911 = vunpack.c.l.b16 %v816
    %v912 = vunpack.c.l.b16 %v817
    %v913 = vunpack.c.h.b16 %v817
    %v914 = vunpack.c.l.b16 %v818
    %v915 = vunpack.c.l.b16 %v819
    %v916 = vunpack.c.h.b16 %v819
    %v917 = vunpack.c.l.b16 %v820
    %v918 = vunpack.c.l.b16 %v821
    %v919 = vunpack.c.h.b16 %v821
    %v920 = vunpack.c.l.b16 %v822
    %v921 = vpack.c.b16 %v876, %v873
    %v922 = vpack.c.b16 %v877, %v874
    %v923 = vpack.c.b16 %v878, %v875
    %v924 = vpack.c.b16 %v882, %v879
    %v925 = vpack.c.b16 %v883, %v880
    %v926 = vpack.c.b16 %v884, %v881
    %v927 = vpack.c.b16 %v888, %v885
    %v928 = vpack.c.b16 %v889, %v886
    %v929 = vpack.c.b16 %v890, %v887
    %v930 = vpack.c.b16 %v894, %v891
    %v931 = vpack.c.b16 %v895, %v892
    %v932 = vpack.c.b16 %v896, %v893
    %v933 = vpack.c.b16 %v900, %v897
    %v934 = vpack.c.b16 %v901, %v898
    %v935 = vpack.c.b16 %v902, %v899
    %v936 = vpack.c.b16 %v906, %v903
    %v937 = vpack.c.b16 %v907, %v904
    %v938 = vpack.c.b16 %v908, %v905
    %v939 = vpack.c.b16 %v912, %v909
    %v940 = vpack.c.b16 %v913, %v910
    %v941 = vpack.c.b16 %v914, %v911
    %v942 = vpack.c.b16 %v918, %v915
    %v943 = vpack.c.b16 %v919, %v916
    %v944 = vpack.c.b16 %v920, %v917
    %969 = vmatprep.subr.bf16.mxu0 %v922
    %970 = vmatpush1.bf16.msra.mxu0 %v921
    %971 = vmatprep.subr.bf16.mxu0 %v925
    %972 = vmatpush1.bf16.msra.mxu0 %v924
    %973 = vmatprep.subr.bf16.mxu0 %v928
    %974 = vmatpush1.bf16.msra.mxu0 %v927
    %975 = vmatprep.subr.bf16.mxu0 %v931
    %976 = vmatpush1.bf16.msra.mxu0 %v930
    %977 = vmatprep.subr.bf16.mxu0 %v934
    %978 = vmatpush1.bf16.msra.mxu0 %v933
    %979 = vmatprep.subr.bf16.mxu0 %v937
    %980 = vmatpush1.bf16.msra.mxu0 %v936
    %981 = vmatprep.subr.bf16.mxu0 %v940
    %982 = vmatpush1.bf16.msra.mxu0 %v939
    %983 = vmatprep.subr.bf16.mxu0 %v943
    %984 = vmatpush1.bf16.msra.mxu0 %v942
    %985 = vmatprep.subr.bf16.mxu0 0
    %986 = vmatpush1.bf16.msra.mxu0 0
    %987 = vmatprep.subr.bf16.mxu0 0
    %988 = vmatpush1.bf16.msra.mxu0 0
    %989 = vmatprep.subr.bf16.mxu0 0
    %990 = vmatpush1.bf16.msra.mxu0 0
    %991 = vmatprep.subr.bf16.mxu0 0
    %992 = vmatpush1.bf16.msra.mxu0 0
    %993 = vmatprep.subr.bf16.mxu0 0
    %994 = vmatpush1.bf16.msra.mxu0 0
    %995 = vmatprep.subr.bf16.mxu0 0
    %996 = vmatpush1.bf16.msra.mxu0 0
    %997 = vmatprep.subr.bf16.mxu0 0
    %998 = vmatpush1.bf16.msra.mxu0 0
    %999 = vmatprep.subr.bf16.mxu0 0
    %1000 = vmatpush1.bf16.msra.mxu0 0
    %1001 = vmatprep.mubr.bf16.mxu0 0
    %1002 = vmatmul.mubr.bf16.gmra.mrb[0].mxu0 %v823
    %v1003 = vpop.f32.mrb[0].mxu0
    %v1004 = vadd.f32 %v829, %v1003
    %v1005 = vpop.f32.mrb[0].mxu0
    %v1006 = vadd.f32 %v833, %v1005
    %v1007 = vpop.f32.mrb[0].mxu0
    %v1008 = vpop.f32.mrb[0].mxu0
    %1009 = vdwg.mxu0
    %1010 = vmatprep.subr.bf16.mxu0 0
    %1011 = vmatpush1.bf16.msra.mxu0 %v923
    %1012 = vmatprep.subr.bf16.mxu0 0
    %1013 = vmatpush1.bf16.msra.mxu0 %v926
    %1014 = vmatprep.subr.bf16.mxu0 0
    %1015 = vmatpush1.bf16.msra.mxu0 %v929
    %1016 = vmatprep.subr.bf16.mxu0 0
    %1017 = vmatpush1.bf16.msra.mxu0 %v932
    %1018 = vmatprep.subr.bf16.mxu0 0
    %1019 = vmatpush1.bf16.msra.mxu0 %v935
    %1020 = vmatprep.subr.bf16.mxu0 0
    %1021 = vmatpush1.bf16.msra.mxu0 %v938
    %1022 = vmatprep.subr.bf16.mxu0 0
    %1023 = vmatpush1.bf16.msra.mxu0 %v941
    %1024 = vmatprep.subr.bf16.mxu0 0
    %1025 = vmatpush1.bf16.msra.mxu0 %v944
    %1026 = vmatprep.subr.bf16.mxu0 0
    %1027 = vmatpush1.bf16.msra.mxu0 0
    %1028 = vmatprep.subr.bf16.mxu0 0
    %1029 = vmatpush1.bf16.msra.mxu0 0
    %1030 = vmatprep.subr.bf16.mxu0 0
    %1031 = vmatpush1.bf16.msra.mxu0 0
    %1032 = vmatprep.subr.bf16.mxu0 0
    %1033 = vmatpush1.bf16.msra.mxu0 0
    %1034 = vmatprep.subr.bf16.mxu0 0
    %1035 = vmatpush1.bf16.msra.mxu0 0
    %1036 = vmatprep.subr.bf16.mxu0 0
    %1037 = vmatpush1.bf16.msra.mxu0 0
    %1038 = vmatprep.subr.bf16.mxu0 0
    %1039 = vmatpush1.bf16.msra.mxu0 0
    %1040 = vmatprep.subr.bf16.mxu0 0
    %1041 = vmatpush1.bf16.msra.mxu0 0
    %1042 = vmatprep.mubr.bf16.mxu0 0
    %1043 = vmatmul.mubr.bf16.gmra.mrb[0].mxu0 %v823
    %v1044 = vpop.f32.mrb[0].mxu0
    %v1045 = vadd.f32 %v837, %v1044
    %v1046 = vpop.f32.mrb[0].mxu0
    %v1047 = vpop.f32.mrb[0].mxu0
    %v1048 = vpop.f32.mrb[0].mxu0
    %1049 = vdwg.mxu0
    %1050 = vst [vmem:[#allocation7] sm:$0xff] %v1004
    %1051 = vst [vmem:[#allocation7 + $0x8] sm:$0xff] %v1006
    %1052 = vst [vmem:[#allocation7 + $0x10] sm:$0xff] %v1045
    // Predicated region
    $region42: #{tpu_custom_call.1} parent=1 // pred_check
      _
    $region43: #{tpu_custom_call.1} parent=1 // pred_check_branch
      %1054 = sbr.rel (0) target = $region45
    $region44: #{tpu_custom_call.1} parent=1 // pred_region
      %s1056 = ssub.s32 384, 384
      %1057 = vsyncadd [#allocation4], %s1056
      %s1059 = sshll.u32 [#allocation7], 4
      %s1060 = int_to_ptr.vmem [resolvable:$true] %s1059
      %1062 = dma.vmem_to_hbm [thread:$0]  %s1060, 384, %s8, [#allocation4]
    $region45: #{tpu_custom_call.1} parent=1 // pred_fallthru
      _
    // Predicated region
    $region46: #{tpu_custom_call.1} parent=1 // pred_check
      _
    $region47: #{tpu_custom_call.1} parent=1 // pred_check_branch
      %1064 = sbr.rel (0) target = $region49
    $region48: #{tpu_custom_call.1} parent=1 // pred_region
      %1065 = dma.done [#allocation4], 384
    $region49: #{tpu_custom_call.1} parent=1 // pred_fallthru
      _
    %1066 = vsyncpa [#allocation3], 1
    %1067 = vsyncpa [#allocation6], 1
    %1068 = vsyncpa [#allocation4], 1

</llo_original>
